<compile_context>
chip_gen: v7x
topology: tpu7x:2x2x1
jax: 0.10.0
libtpu: 0.0.40
codegen_flags: <defaults>
</compile_context>

<pallas_src>
import jax
import jax.numpy as jnp
import numpy as np
from jax.experimental import pallas as pl
from jax.experimental.pallas import tpu as pltpu

NUM_CONDITIONS = 6
CHANNELS = 768
BAND = 128                            # channels per condition band == lane width
MAX_BLOCK_BYTES = 2 * 1024 * 1024     # ~2 MiB tiles: near HBM-roofline plateau, fits all gens
SMALL_PATH_BYTES = 1 * 1024 * 1024    # per-sample cutover to the whole-sample path


def _cdiv(a, b):
    return -(-a // b)


def _round_up(a, m):
    return _cdiv(a, m) * m


def _band_mask_kernel(c_ref, x_ref, o_ref):
    """Main path: x_ref is always a tile of the *selected* band; o_ref cycles bands."""
    band = pl.program_id(1)
    cond = c_ref[0]

    @pl.when(band == cond)
    def _():
        o_ref[...] = x_ref[...]

    @pl.when(band != cond)
    def _():
        o_ref[...] = jnp.zeros_like(o_ref)


def _per_sample_mask_kernel(c_ref, x_ref, o_ref):
    """Small path: whole (1, 6, rows, 128) sample per step, masked by band id."""
    cond = c_ref[0]
    band_ids = jax.lax.broadcasted_iota(jnp.int32, o_ref.shape, 1)
    o_ref[...] = jnp.where(band_ids == cond, x_ref[...], 0).astype(o_ref.dtype)


def conditional_simnet_forward(x, c_idx):
    """x: (B, 768, H, W); c_idx: int32 scalar or shape-(1,) array with value in [0, 6)."""
    b, ch, h, w = x.shape
    assert ch == CHANNELS, "channel dim must be 768"
    rows = h * w
    itemsize = jnp.dtype(x.dtype).itemsize

    # Clamp so a bad condition index can never drive an out-of-bounds band DMA.
    cond = jnp.clip(jnp.asarray(c_idx, jnp.int32).reshape(1), 0, NUM_CONDITIONS - 1)

    # Pure row-major reinterpretation: band index == channel // 128.
    x4 = x.reshape(b, NUM_CONDITIONS, rows, BAND)

    sample_bytes = NUM_CONDITIONS * rows * BAND * itemsize

    if sample_bytes <= SMALL_PATH_BYTES:
        # ---- small-spatial path: one full batch element per grid step ----
        blk = (1, NUM_CONDITIONS, rows, BAND)
        out4 = pl.pallas_call(
            _per_sample_mask_kernel,
            out_shape=jax.ShapeDtypeStruct(x4.shape, x.dtype),
            grid_spec=pltpu.PrefetchScalarGridSpec(
                num_scalar_prefetch=1,
                grid=(b,),
                in_specs=[pl.BlockSpec(blk, lambda bi, c: (bi, 0, 0, 0))],
                out_specs=pl.BlockSpec(blk, lambda bi, c: (bi, 0, 0, 0)),
            ),
            compiler_params=pltpu.CompilerParams(
                dimension_semantics=("parallel",)),
            cost_estimate=pl.CostEstimate(
                flops=0, transcendentals=0,
                bytes_accessed=2 * x.size * itemsize),
        )(cond, x4)
        return out4.reshape(x.shape)

    # ---- main (banded) path ----
    sublane = {4: 8, 2: 16, 1: 32}.get(itemsize, 8)
    rt = max(sublane, (MAX_BLOCK_BYTES // (BAND * itemsize)) // sublane * sublane)
    rt = min(rt, rows)                 # full-dim block is always legal
    st = _cdiv(rows, rt)
    # Guarantee >= 2 blocks on the parallel axis so both v7x TensorCores (and
    # both halves of its HBM bandwidth) get work even when B == 1.
    if b * st < 2 and rows > sublane:
        rt = max(sublane, _round_up(_cdiv(rows, 2), sublane))
        st = _cdiv(rows, rt)

    grid = (b * st, NUM_CONDITIONS)    # band innermost -> x block index constant
    blk = (1, 1, rt, BAND)

    # x: always fetch the selected band's slab for this (batch, spatial tile);
    # constant across the inner band loop -> DMA'd once per group.
    x_spec = pl.BlockSpec(blk, lambda g, band, c: (g // st, c[0], g % st, 0))
    # output: walk every band.
    o_spec = pl.BlockSpec(blk, lambda g, band, c: (g // st, band, g % st, 0))

    out4 = pl.pallas_call(
        _band_mask_kernel,
        out_shape=jax.ShapeDtypeStruct(x4.shape, x.dtype),
        grid_spec=pltpu.PrefetchScalarGridSpec(
            num_scalar_prefetch=1,
            grid=grid,
            in_specs=[x_spec],
            out_specs=o_spec,
        ),
        compiler_params=pltpu.CompilerParams(
            dimension_semantics=("parallel", "arbitrary")),
        cost_estimate=pl.CostEstimate(
            flops=0, transcendentals=0,
            bytes_accessed=(x.size * itemsize * (NUM_CONDITIONS + 1)) // NUM_CONDITIONS),
        # TODO(synk): if the caller can donate x, alias it onto the output
        # (input_output_aliases={1: 0}), drop the x input stream and zero-fill
        # only the 5 non-selected bands -> ~0.83N HBM traffic instead of ~1.17N.
    )(cond, x4)

    return out4.reshape(x.shape)


if __name__ == "__main__":
    key0, key1 = jax.random.split(jax.random.PRNGKey(0))

    def reference(x, cond):
        keep = (jnp.arange(x.shape[1])[None, :, None, None] // BAND == cond)
        return x * keep.astype(x.dtype)

    # Small-spatial path (B=2, 4x4 spatial): whole-sample masked copy.
    x_small = jax.random.normal(key0, (2, CHANNELS, 4, 4), dtype=jnp.float32)
    c_small = jnp.array([3], dtype=jnp.int32)
    out_small = jax.block_until_ready(conditional_simnet_forward(x_small, c_small))
    np.testing.assert_array_equal(np.asarray(out_small),
                                  np.asarray(reference(x_small, 3)))

    # Banded path (B=1, 20x21 spatial): exercises the fused parallel axis,
    # the cdiv grid with a ragged last tile, and the scalar-driven x fetch.
    x_big = jax.random.normal(key1, (1, CHANNELS, 20, 21), dtype=jnp.float32)
    c_big = jnp.array([5], dtype=jnp.int32)
    out_big = jax.block_until_ready(conditional_simnet_forward(x_big, c_big))
    np.testing.assert_array_equal(np.asarray(out_big),
                                  np.asarray(reference(x_big, 5)))

    print("KERNEL_OK")
</pallas_src>

<mosaic_0001>
module attributes {stable_mosaic.version = 11 : i64} {
  func.func @_per_sample_mask_kernel(%arg0: i32, %arg1: memref<1xi32, #tpu.memory_space<smem>>, %arg2: memref<1x6x16x128xf32, #tpu.memory_space<vmem>>, %arg3: memref<1x6x16x128xf32, #tpu.memory_space<vmem>>) attributes {dimension_semantics = [#tpu.dimension_semantics<parallel>], iteration_bounds = array<i64: 2>, scalar_prefetch = 1 : i64, scratch_operands = 0 : i64, tpu.core_type = #tpu.core_type<tc>, window_params = [{transform_indices = @transform_0, window_bounds = array<i64: 1, 6, 16, 128>}, {transform_indices = @transform_1, window_bounds = array<i64: 1, 6, 16, 128>}]} {
    %c0 = arith.constant 0 : index
    %0 = memref.load %arg1[%c0] : memref<1xi32, #tpu.memory_space<smem>>
    %1 = tpu.iota {dimensions = array<i32: 1>} : vector<1x6x16x128xi32>
    %2 = vector.broadcast %0 : i32 to vector<1x6x16x128xi32>
    %3 = arith.cmpi eq, %1, %2 : vector<1x6x16x128xi32>
    %c0_0 = arith.constant 0 : index
    %c0_1 = arith.constant 0 : index
    %c0_2 = arith.constant 0 : index
    %c0_3 = arith.constant 0 : index
    %4 = vector.load %arg2[%c0_0, %c0_1, %c0_2, %c0_3] : memref<1x6x16x128xf32, #tpu.memory_space<vmem>>, vector<1x6x16x128xf32>
    %c0_i32 = arith.constant 0 : i32
    %5 = arith.sitofp %c0_i32 : i32 to f32
    %6 = vector.broadcast %5 : f32 to vector<1x6x16x128xf32>
    %7 = arith.select %3, %4, %6 : vector<1x6x16x128xi1>, vector<1x6x16x128xf32>
    %c0_4 = arith.constant 0 : index
    %c0_5 = arith.constant 0 : index
    %c0_6 = arith.constant 0 : index
    %c0_7 = arith.constant 0 : index
    %8 = vector.load %arg3[%c0_4, %c0_5, %c0_6, %c0_7] : memref<1x6x16x128xf32, #tpu.memory_space<vmem>>, vector<1x6x16x128xf32>
    tpu.vector_store %arg3[%c0_4, %c0_5, %c0_6, %c0_7], %7 {strides = array<i32>} : memref<1x6x16x128xf32, #tpu.memory_space<vmem>>, vector<1x6x16x128xf32>,
    return
  }
  func.func @transform_0(%arg0: i32, %arg1: memref<1xi32, #tpu.memory_space<smem>>) -> (i32, i32, i32, i32) {
    %c0_i32 = arith.constant 0 : i32
    %c0_i32_0 = arith.constant 0 : i32
    %c0_i32_1 = arith.constant 0 : i32
    %c0_i32_2 = arith.constant 0 : i32
    return %arg0, %c0_i32, %c0_i32_0, %c0_i32_1 : i32, i32, i32, i32
  }
  func.func @transform_1(%arg0: i32, %arg1: memref<1xi32, #tpu.memory_space<smem>>) -> (i32, i32, i32, i32) {
    %c0_i32 = arith.constant 0 : i32
    %c0_i32_0 = arith.constant 0 : i32
    %c0_i32_1 = arith.constant 0 : i32
    %c0_i32_2 = arith.constant 0 : i32
    return %arg0, %c0_i32, %c0_i32_0, %c0_i32_1 : i32, i32, i32, i32
  }
}

</mosaic_0001>

<llo_original>
// kernel: tpu_custom_call.1
$region0: #{tpu_custom_call.1}
  #allocation0 [shape = 'u32[]', space=smem, size = 0x4, offset = 0x4, fixed_abs, tag = 'smem constant byte address 0x4 - core index']
  #allocation1 [shape = 'u32[144,128]{1,0:T(1,128)}', space=vmem, size = 0x12000, scoped, tag = 'internal scratch']
  #allocation2 [shape = 's32[1]{0}', space=sflag, size = 0x4, scoped, tag = 'scoped memory for tpu_custom_call.1']
  #allocation3 [shape = 's32[1]{0:T(128)S(6)}', space=smem, size = 0x200, scoped, tag = 'prefetched SMEM operand 0']
  %s0 = inlined_call_operand.<no memory space> [shape: s32[1], index: 0, kind: input, shape index: {}]
  %s1 = inlined_call_operand.hbm [shape: f32[2,6,16,128], index: 1, kind: input, shape index: {}]
  %s2 = inlined_call_operand.hbm [shape: f32[2,6,16,128], index: 2, kind: output, shape index: {}]
  %s3 = sld [smem:[#allocation0]]
  $region41: #{tpu_custom_call.1} parent=0
    _
  %s5 = ssub.s32 1, %s3
  %s6 = scalar_select 0, %s5, %s3
  %7 = sst [smem:[#allocation3]] %s0
  $region1: #{tpu_custom_call.1} parent=0
    #allocation4 [shape = 'u8[98304]{0}', space=vmem, size = 0x18000, scoped, tag = 'input window, operand 1']
    #allocation5 [shape = 's32[2]{0}', space=sflag, size = 0x8, scoped, tag = 'scoped memory for tpu_custom_call.1']
    #allocation6 [shape = 's32[2]{0}', space=sflag, size = 0x8, scoped, tag = 'scoped memory for tpu_custom_call.1']
    #allocation7 [shape = 'u8[98304]{0}', space=vmem, size = 0x18000, scoped, tag = 'output window, operand 0']
    %8 = vsyncpa [#allocation5], 0
    %s9 = scalar_lea.sflag [#allocation5], 1
    %10 = vsyncpa %s9, 0
    %11 = vsyncpa [#allocation6], 0
    %s12 = scalar_lea.sflag [#allocation6], 1
    %13 = vsyncpa %s12, 0
    loop: start=0, step=1, limit=4
    $region2: #{tpu_custom_call.1} parent=1 // loop_pre_header
      _
    $region3: #{tpu_custom_call.1} parent=1 // loop_header
      %s15 = sphi 0, %s19
      %p16 = scmp.ge.s32.totalorder %s15, 4
      %s25 = sphi 0, %s27
      %s28 = sphi 0, %s25
      %s29 = sphi 0, %s28
      %s45 = sphi 0, %s29
      %s51 = sphi 0, %s53
      %s54 = sphi 0, %s51
      %s55 = sphi 0, %s54
      %s71 = sphi 0, %s55
    $region4: #{tpu_custom_call.1} parent=1 // loop_header_branch
      %18 = sbr.rel (%p16) target = $region8
    $region5: #{tpu_custom_call.1} parent=1 // loop_body
      %s20 = ssub.s32 %s15, 1
      %s21 = ssub.s32 %s15, 2
      %s22 = sadd.s32 %s15, 1
      %s23 = ssub.s32 %s15, %s22
      %p24 = scmp.eq.s32.totalorder %s23, 0
      %s26 = sadd.s32 %s25, 1
      %s27 = scalar_select %p24, %s25, %s26
      %p30 = pneg %p24
      %p31 = scmp.eq.s32.totalorder %s15, 1
      %p32 = por %p30, %p31
      %p33 = scmp.ne.s32.totalorder %s25, %s28
      %p34 = scmp.eq.s32.totalorder %s15, 0
      %p35 = por %p33, %p34
      %p36 = scmp.ne.s32.totalorder %s25, %s28
      %p37 = scmp.eq.s32.totalorder %s20, 1
      %p38 = por %p36, %p37
      %p39 = scmp.ne.s32.totalorder %s28, %s29
      %p40 = scmp.eq.s32.totalorder %s20, 0
      %p41 = por %p39, %p40
      %p42 = scmp.ne.s32.totalorder %s28, %s29
      %p43 = scmp.eq.s32.totalorder %s21, 1
      %p44 = por %p42, %p43
      %p46 = scmp.ne.s32.totalorder %s29, %s45
      %p47 = scmp.eq.s32.totalorder %s21, 0
      %p48 = por %p46, %p47
      %s49 = ssub.s32 %s15, %s22
      %p50 = scmp.eq.s32.totalorder %s49, 0
      %s52 = sadd.s32 %s51, 1
      %s53 = scalar_select %p50, %s51, %s52
      %p56 = pneg %p50
      %p57 = scmp.eq.s32.totalorder %s15, 1
      %p58 = por %p56, %p57
      %p59 = scmp.ne.s32.totalorder %s51, %s54
      %p60 = scmp.eq.s32.totalorder %s15, 0
      %p61 = por %p59, %p60
      %p62 = scmp.ne.s32.totalorder %s51, %s54
      %p63 = scmp.eq.s32.totalorder %s20, 1
      %p64 = por %p62, %p63
      %p65 = scmp.ne.s32.totalorder %s54, %s55
      %p66 = scmp.eq.s32.totalorder %s20, 0
      %p67 = por %p65, %p66
      %p68 = scmp.ne.s32.totalorder %s54, %s55
      %p69 = scmp.eq.s32.totalorder %s21, 1
      %p70 = por %p68, %p69
      %p72 = scmp.ne.s32.totalorder %s55, %s71
      %p73 = scmp.eq.s32.totalorder %s21, 0
      %p74 = por %p72, %p73
      %p75 = scmp.le.s32.totalorder 1, %s15
      %p76 = scmp.lt.s32.totalorder %s15, 3
      %p77 = pnand %p75, %p76
      %p78 = pneg %p77
      // Predicated region
      $region9: #{tpu_custom_call.1} parent=5 // pred_check
        _
      $region10: #{tpu_custom_call.1} parent=5 // pred_check_branch
        %80 = sbr.rel (%p77) target = $region12
      $region11: #{tpu_custom_call.1} parent=5 // pred_region
        %s81 = ssub.s32 %s15, 1
      $region12: #{tpu_custom_call.1} parent=5 // pred_fallthru
        _
      %p82 = scmp.lt.s32.totalorder %s15, 2
      // Predicated region
      $region13: #{tpu_custom_call.1} parent=5 // pred_check
        %p83 = pneg %p82
      $region14: #{tpu_custom_call.1} parent=5 // pred_check_branch
        %85 = sbr.rel (%p83) target = $region16
      $region15: #{tpu_custom_call.1} parent=5 // pred_region
        // Predicated region
        $region17: #{tpu_custom_call.1} parent=15 // pred_check
          %p86 = pneg %p35
        $region18: #{tpu_custom_call.1} parent=15 // pred_check_branch
          %88 = sbr.rel (%p86) target = $region20
        $region19: #{tpu_custom_call.1} parent=15 // pred_region
          %s89 = sand.u32 %s25, 1
          %s90 = scalar_lea.sflag [#allocation5], %s89
          %s91 = sand.u32 %s25, 1
          %s92 = smul.addr %s91, 96
          %s93 = scalar_lea.vmem [#allocation4], %s92
          %s95 = ssub.s32 1536, 1536
          %96 = vsyncadd %s90, %s95
          %s97 = smul.addr %s15, 12
          %s98 = smul.addr %s97, 128
          %s99 = scalar_lea.hbm %s1, %s98
          %s100 = sshll.u32 %s93, 4
          %s101 = int_to_ptr.vmem [resolvable:$true] %s100
          %106 = dma.hbm_to_vmem [thread:$0]  %s99, 1536, %s101, %s90, 128, 128, 8
        $region20: #{tpu_custom_call.1} parent=15 // pred_fallthru
          _
      $region16: #{tpu_custom_call.1} parent=5 // pred_fallthru
        _
      %p107 = scmp.le.s32.totalorder 1, %s15
      %p108 = scmp.lt.s32.totalorder %s15, 3
      %p109 = pnand %p107, %p108
      %p110 = pneg %p109
      // Predicated region
      $region21: #{tpu_custom_call.1} parent=5 // pred_check
        _
      $region22: #{tpu_custom_call.1} parent=5 // pred_check_branch
        %112 = sbr.rel (%p109) target = $region24
      $region23: #{tpu_custom_call.1} parent=5 // pred_region
        %s113 = ssub.s32 %s15, 1
        %s114 = sand.u32 %s28, 1
        %s115 = scalar_lea.sflag [#allocation5], %s114
        %s116 = sand.u32 %s28, 1
        %s117 = smul.addr %s116, 96
        %s118 = scalar_lea.vmem [#allocation4], %s117
        // Predicated region
        $region25: #{tpu_custom_call.1} parent=23 // pred_check
          %p119 = pneg %p41
        $region26: #{tpu_custom_call.1} parent=23 // pred_check_branch
          %121 = sbr.rel (%p119) target = $region28
        $region27: #{tpu_custom_call.1} parent=23 // pred_region
          %122 = dma.done %s115, 1536
        $region28: #{tpu_custom_call.1} parent=23 // pred_fallthru
          _
        %s123 = sand.u32 %s28, 1
        %s124 = scalar_lea.sflag [#allocation5], %s123
        %s125 = sand.u32 %s28, 1
        %s126 = smul.addr %s125, 96
        %s127 = scalar_lea.vmem [#allocation4], %s126
        %p128 = pneg %p41
        %p129 = pneg %p38
        %p130 = pneg %p67
        %p131 = pneg %p64
        %s132 = sand.u32 %s54, 1
        %s133 = scalar_lea.sflag [#allocation6], %s132
        %s134 = sand.u32 %s54, 1
        %s135 = smul.addr %s134, 96
        %s136 = scalar_lea.vmem [#allocation7], %s135
        %s137 = sld [smem:[#allocation3]]
        %v138 = vstv %s137
        %vm139 = vcmp.eq.s32.totalorder %v138, 0
        %vm140 = vcmp.eq.s32.totalorder %v138, 1
        %vm141 = vcmp.eq.s32.totalorder %v138, 2
        %vm142 = vcmp.eq.s32.totalorder %v138, 3
        %vm143 = vcmp.eq.s32.totalorder %v138, 4
        %vm144 = vcmp.eq.s32.totalorder %v138, 5
        %v145 = vld [vmem:[%s118] sm:$0xff]
        %v146 = vld [vmem:[%s118 + $0x8] sm:$0xff]
        %v147 = vld [vmem:[%s118 + $0x10] sm:$0xff]
        %v148 = vld [vmem:[%s118 + $0x18] sm:$0xff]
        %v149 = vld [vmem:[%s118 + $0x20] sm:$0xff]
        %v150 = vld [vmem:[%s118 + $0x28] sm:$0xff]
        %v151 = vld [vmem:[%s118 + $0x30] sm:$0xff]
        %v152 = vld [vmem:[%s118 + $0x38] sm:$0xff]
        %v153 = vld [vmem:[%s118 + $0x40] sm:$0xff]
        %v154 = vld [vmem:[%s118 + $0x48] sm:$0xff]
        %v155 = vld [vmem:[%s118 + $0x50] sm:$0xff]
        %v156 = vld [vmem:[%s118 + $0x58] sm:$0xff]
        %v157 = vsel %vm139, %v145, 0.0
        %v158 = vsel %vm139, %v146, 0.0
        %v159 = vsel %vm140, %v147, 0.0
        %v160 = vsel %vm140, %v148, 0.0
        %v161 = vsel %vm141, %v149, 0.0
        %v162 = vsel %vm141, %v150, 0.0
        %v163 = vsel %vm142, %v151, 0.0
        %v164 = vsel %vm142, %v152, 0.0
        %v165 = vsel %vm143, %v153, 0.0
        %v166 = vsel %vm143, %v154, 0.0
        %v167 = vsel %vm144, %v155, 0.0
        %v168 = vsel %vm144, %v156, 0.0
        %169 = vst [vmem:[%s136] sm:$0xff] %v157
        %170 = vst [vmem:[%s136 + $0x8] sm:$0xff] %v158
        %171 = vst [vmem:[%s136 + $0x10] sm:$0xff] %v159
        %172 = vst [vmem:[%s136 + $0x18] sm:$0xff] %v160
        %173 = vst [vmem:[%s136 + $0x20] sm:$0xff] %v161
        %174 = vst [vmem:[%s136 + $0x28] sm:$0xff] %v162
        %175 = vst [vmem:[%s136 + $0x30] sm:$0xff] %v163
        %176 = vst [vmem:[%s136 + $0x38] sm:$0xff] %v164
        %177 = vst [vmem:[%s136 + $0x40] sm:$0xff] %v165
        %178 = vst [vmem:[%s136 + $0x48] sm:$0xff] %v166
        %179 = vst [vmem:[%s136 + $0x50] sm:$0xff] %v167
        %180 = vst [vmem:[%s136 + $0x58] sm:$0xff] %v168
        %s181 = sand.u32 %s54, 1
        %s182 = scalar_lea.sflag [#allocation6], %s181
        %s183 = sand.u32 %s54, 1
        %s184 = smul.addr %s183, 96
        %s185 = scalar_lea.vmem [#allocation7], %s184
        // Predicated region
        $region29: #{tpu_custom_call.1} parent=23 // pred_check
          %p186 = pneg %p64
        $region30: #{tpu_custom_call.1} parent=23 // pred_check_branch
          %188 = sbr.rel (%p186) target = $region32
        $region31: #{tpu_custom_call.1} parent=23 // pred_region
          %s190 = ssub.s32 1536, 1536
          %191 = vsyncadd %s182, %s190
          %s192 = smul.addr %s20, 12
          %s193 = smul.addr %s192, 128
          %s194 = scalar_lea.hbm %s2, %s193
          %s195 = sshll.u32 %s185, 4
          %s196 = int_to_ptr.vmem [resolvable:$true] %s195
          %201 = dma.vmem_to_hbm [thread:$0]  %s196, 1536, %s194, %s182, 128, 128, 8
        $region32: #{tpu_custom_call.1} parent=23 // pred_fallthru
          _
      $region24: #{tpu_custom_call.1} parent=5 // pred_fallthru
        _
      %p202 = scmp.le.s32.totalorder 2, %s15
      // Predicated region
      $region33: #{tpu_custom_call.1} parent=5 // pred_check
        %p203 = pneg %p202
      $region34: #{tpu_custom_call.1} parent=5 // pred_check_branch
        %205 = sbr.rel (%p203) target = $region36
      $region35: #{tpu_custom_call.1} parent=5 // pred_region
        %s206 = ssub.s32 %s15, 2
        // Predicated region
        $region37: #{tpu_custom_call.1} parent=35 // pred_check
          %p207 = pneg %p70
        $region38: #{tpu_custom_call.1} parent=35 // pred_check_branch
          %209 = sbr.rel (%p207) target = $region40
        $region39: #{tpu_custom_call.1} parent=35 // pred_region
          %s210 = sand.u32 %s55, 1
          %s211 = scalar_lea.sflag [#allocation6], %s210
          %s212 = sand.u32 %s55, 1
          %s213 = smul.addr %s212, 96
          %s214 = scalar_lea.vmem [#allocation7], %s213
          %215 = dma.done %s211, 1536
        $region40: #{tpu_custom_call.1} parent=35 // pred_fallthru
          _
      $region36: #{tpu_custom_call.1} parent=5 // pred_fallthru
        _
    $region6: #{tpu_custom_call.1} parent=1 // loop_footer
      %s19 = sadd.s32 1, %s15
    $region7: #{tpu_custom_call.1} parent=1 // loop_footer_branch
      %14 = sbr.rel target = $region3
    $region8: #{tpu_custom_call.1} parent=1 // loop_exit
      _
    %216 = vsyncpa [#allocation5], 1
    %s217 = scalar_lea.sflag [#allocation5], 1
    %218 = vsyncpa %s217, 1
    %219 = vsyncpa [#allocation6], 1
    %s220 = scalar_lea.sflag [#allocation6], 1
    %221 = vsyncpa %s220, 1

</llo_original>
